<compile_context>
chip_gen: v7x
topology: tpu7x:2x2x1
jax: 0.10.0
libtpu: 0.0.40
codegen_flags: <defaults>
</compile_context>

<pallas_src>
import jax
import jax.numpy as jnp
from jax.experimental import pallas as pl
from jax.experimental.pallas import tpu as pltpu

IN_DIM = 4     # CartPole-v0 observation dim
OUT_DIM = 2    # CartPole-v0 action dim


def _policy_kernel(x_ref, wt_ref, b_ref, out_ref):
    # x_ref:  [B, IN_DIM]        (unpadded observations)
    # wt_ref: [IN_DIM, OUT_DIM]  (W^T, pre-transposed in prepare_params)
    # b_ref:  [1, OUT_DIM]
    # out_ref:[B, OUT_DIM]       (softmax action probabilities)
    x = x_ref[...]
    wt = wt_ref[...]
    in_dim = x.shape[1]

    # Tiny static contraction (K=4): unrolled VPU broadcast-mul-add instead of
    # paying MXU fill/drain for a 2-column matmul.
    logits = b_ref[...] + x[:, 0:1] * wt[0:1, :]
    for k in range(1, in_dim):
        logits = logits + x[:, k:k + 1] * wt[k:k + 1, :]

    # Numerically-stable softmax over the last dim (only OUT_DIM real lanes;
    # Mosaic masks layout padding in the reductions, so no explicit mask).
    m = jnp.max(logits, axis=-1, keepdims=True)
    e = jnp.exp(logits - m)
    s = jnp.sum(e, axis=-1, keepdims=True)
    # Exact divide: downstream categorical sampling / log-prob grads need
    # probs that sum to exactly 1 (approx vrcp broke the tolerance check).
    out_ref[...] = e / s


def prepare_params(weight, bias):
    """Transpose/reshape nn.Linear params once per update; reuse per forward.

    weight: [OUT_DIM, IN_DIM] (PyTorch nn.Linear layout), bias: [OUT_DIM]
    returns wt [IN_DIM, OUT_DIM], b [1, OUT_DIM]
    """
    wt = jnp.asarray(weight, jnp.float32).T
    b = jnp.asarray(bias, jnp.float32).reshape(1, -1)
    return wt, b


@jax.jit
def policy_forward(x, wt, b):
    """softmax(x @ W^T + b, dim=1) -- a single Pallas custom call under jit.

    x: [B, IN_DIM] float32 -> [B, OUT_DIM] float32 action probabilities
    """
    B, in_dim = x.shape
    out_dim = wt.shape[1]

    cost = pl.CostEstimate(
        flops=2 * B * in_dim * out_dim + 4 * B * out_dim,
        transcendentals=B * out_dim,
        bytes_accessed=4 * (B * in_dim + in_dim * out_dim + out_dim
                            + B * out_dim),
    )

    vmem = pl.BlockSpec(memory_space=pltpu.MemorySpace.VMEM)
    return pl.pallas_call(
        _policy_kernel,
        out_shape=jax.ShapeDtypeStruct((B, out_dim), jnp.float32),
        in_specs=[vmem, vmem, vmem],
        out_specs=vmem,
        cost_estimate=cost,
    )(x.astype(jnp.float32), wt, b)


if __name__ == "__main__":
    key = jax.random.PRNGKey(0)
    k_x, k_w, k_b = jax.random.split(key, 3)

    batch = 8
    x = jax.random.normal(k_x, (batch, IN_DIM), dtype=jnp.float32)

    # Deterministic init mimicking nn.Linear default: U(-1/sqrt(in), 1/sqrt(in))
    bound = 1.0 / (IN_DIM ** 0.5)
    weight = jax.random.uniform(k_w, (OUT_DIM, IN_DIM), jnp.float32, -bound, bound)
    bias = jax.random.uniform(k_b, (OUT_DIM,), jnp.float32, -bound, bound)

    # Hoisted out of the hot forward path (done once per parameter update).
    wt, b = prepare_params(weight, bias)

    probs = policy_forward(x, wt, b)
    probs = jax.block_until_ready(probs)

    # Pure-JAX reference.
    ref = jax.nn.softmax(x @ weight.T + bias, axis=1)
    assert probs.shape == (batch, OUT_DIM)
    assert jnp.allclose(probs, ref, atol=1e-5, rtol=1e-5)
    assert jnp.allclose(jnp.sum(probs, axis=1), 1.0, atol=1e-5)

    print("KERNEL_OK")
</pallas_src>

<mosaic_0001>
module attributes {stable_mosaic.version = 11 : i64} {
  func.func @_policy_kernel(%arg0: memref<8x4xf32, #tpu.memory_space<vmem>>, %arg1: memref<4x2xf32, #tpu.memory_space<vmem>>, %arg2: memref<1x2xf32, #tpu.memory_space<vmem>>, %arg3: memref<8x2xf32, #tpu.memory_space<vmem>>) attributes {dimension_semantics = [], scalar_prefetch = 0 : i64, scratch_operands = 0 : i64, tpu.core_type = #tpu.core_type<tc>} {
    %c0 = arith.constant 0 : index
    %c0_0 = arith.constant 0 : index
    %0 = vector.load %arg0[%c0, %c0_0] : memref<8x4xf32, #tpu.memory_space<vmem>>, vector<8x4xf32>
    %c0_1 = arith.constant 0 : index
    %c0_2 = arith.constant 0 : index
    %1 = vector.load %arg1[%c0_1, %c0_2] : memref<4x2xf32, #tpu.memory_space<vmem>>, vector<4x2xf32>
    %c0_3 = arith.constant 0 : index
    %c0_4 = arith.constant 0 : index
    %2 = vector.load %arg2[%c0_3, %c0_4] : memref<1x2xf32, #tpu.memory_space<vmem>>, vector<1x2xf32>
    %3 = vector.extract_strided_slice %0 {offsets = [0, 0], sizes = [8, 1], strides = [1, 1]} : vector<8x4xf32> to vector<8x1xf32>
    %4 = vector.extract_strided_slice %1 {offsets = [0, 0], sizes = [1, 2], strides = [1, 1]} : vector<4x2xf32> to vector<1x2xf32>
    %5 = vector.broadcast %3 : vector<8x1xf32> to vector<8x2xf32>
    %6 = vector.broadcast %4 : vector<1x2xf32> to vector<8x2xf32>
    %7 = arith.mulf %5, %6 : vector<8x2xf32>
    %8 = vector.broadcast %2 : vector<1x2xf32> to vector<8x2xf32>
    %9 = arith.addf %8, %7 : vector<8x2xf32>
    %10 = vector.extract_strided_slice %0 {offsets = [0, 1], sizes = [8, 1], strides = [1, 1]} : vector<8x4xf32> to vector<8x1xf32>
    %11 = vector.extract_strided_slice %1 {offsets = [1, 0], sizes = [1, 2], strides = [1, 1]} : vector<4x2xf32> to vector<1x2xf32>
    %12 = vector.broadcast %10 : vector<8x1xf32> to vector<8x2xf32>
    %13 = vector.broadcast %11 : vector<1x2xf32> to vector<8x2xf32>
    %14 = arith.mulf %12, %13 : vector<8x2xf32>
    %15 = arith.addf %9, %14 : vector<8x2xf32>
    %16 = vector.extract_strided_slice %0 {offsets = [0, 2], sizes = [8, 1], strides = [1, 1]} : vector<8x4xf32> to vector<8x1xf32>
    %17 = vector.extract_strided_slice %1 {offsets = [2, 0], sizes = [1, 2], strides = [1, 1]} : vector<4x2xf32> to vector<1x2xf32>
    %18 = vector.broadcast %16 : vector<8x1xf32> to vector<8x2xf32>
    %19 = vector.broadcast %17 : vector<1x2xf32> to vector<8x2xf32>
    %20 = arith.mulf %18, %19 : vector<8x2xf32>
    %21 = arith.addf %15, %20 : vector<8x2xf32>
    %22 = vector.extract_strided_slice %0 {offsets = [0, 3], sizes = [8, 1], strides = [1, 1]} : vector<8x4xf32> to vector<8x1xf32>
    %23 = vector.extract_strided_slice %1 {offsets = [3, 0], sizes = [1, 2], strides = [1, 1]} : vector<4x2xf32> to vector<1x2xf32>
    %24 = vector.broadcast %22 : vector<8x1xf32> to vector<8x2xf32>
    %25 = vector.broadcast %23 : vector<1x2xf32> to vector<8x2xf32>
    %26 = arith.mulf %24, %25 : vector<8x2xf32>
    %27 = arith.addf %21, %26 : vector<8x2xf32>
    %cst = arith.constant dense<0xFF800000> : vector<8xf32>
    %28 = vector.multi_reduction <maximumf>, %27, %cst [1] : vector<8x2xf32> to vector<8xf32>
    %29 = vector.shape_cast %28 : vector<8xf32> to vector<8x1xf32>
    %30 = vector.broadcast %29 : vector<8x1xf32> to vector<8x2xf32>
    %31 = arith.subf %27, %30 : vector<8x2xf32>
    %32 = math.exp %31 : vector<8x2xf32>
    %cst_5 = arith.constant dense<0.000000e+00> : vector<8xf32>
    %33 = vector.multi_reduction <add>, %32, %cst_5 [1] : vector<8x2xf32> to vector<8xf32>
    %34 = vector.shape_cast %33 : vector<8xf32> to vector<8x1xf32>
    %35 = vector.broadcast %34 : vector<8x1xf32> to vector<8x2xf32>
    %36 = arith.divf %32, %35 : vector<8x2xf32>
    %c0_6 = arith.constant 0 : index
    %c0_7 = arith.constant 0 : index
    %37 = vector.load %arg3[%c0_6, %c0_7] : memref<8x2xf32, #tpu.memory_space<vmem>>, vector<8x2xf32>
    tpu.vector_store %arg3[%c0_6, %c0_7], %36 {strides = array<i32>} : memref<8x2xf32, #tpu.memory_space<vmem>>, vector<8x2xf32>,
    return
  }
}

</mosaic_0001>

<llo_original>
// kernel: policy_forward.1
$region0: #{policy_forward.1}
  #allocation0 [shape = 'u32[]', space=smem, size = 0x4, offset = 0x4, fixed_abs, tag = 'smem constant byte address 0x4 - core index']
  #allocation1 [shape = 'u32[144,128]{1,0:T(1,128)}', space=vmem, size = 0x12000, scoped, tag = 'internal scratch']
  %s0 = inlined_call_operand.vmem [shape: f32[8,4], index: 0, kind: input, shape index: {}]
  %s1 = inlined_call_operand.vmem [shape: f32[4,2], index: 1, kind: input, shape index: {}]
  %s2 = inlined_call_operand.vmem [shape: f32[1,2], index: 2, kind: input, shape index: {}]
  %s3 = inlined_call_operand.vmem [shape: f32[8,2], index: 3, kind: output, shape index: {}]
  %s4 = sld [smem:[#allocation0]]
  $region22: #{policy_forward.1} parent=0
    _
  %s6 = ssub.s32 1, %s4
  %s7 = scalar_select 0, %s6, %s4
  // Predicated region
  $region2: #{policy_forward.1} parent=0 // pred_check
    _
  $region3: #{policy_forward.1} parent=0 // pred_check_branch
    %9 = sbr.rel (0) target = $region5
  $region4: #{policy_forward.1} parent=0 // pred_region
    _
  $region5: #{policy_forward.1} parent=0 // pred_fallthru
    _
  // Predicated region
  $region6: #{policy_forward.1} parent=0 // pred_check
    _
  $region7: #{policy_forward.1} parent=0 // pred_check_branch
    %11 = sbr.rel (0) target = $region9
  $region8: #{policy_forward.1} parent=0 // pred_region
    _
  $region9: #{policy_forward.1} parent=0 // pred_fallthru
    _
  // Predicated region
  $region10: #{policy_forward.1} parent=0 // pred_check
    _
  $region11: #{policy_forward.1} parent=0 // pred_check_branch
    %13 = sbr.rel (0) target = $region13
  $region12: #{policy_forward.1} parent=0 // pred_region
    _
  $region13: #{policy_forward.1} parent=0 // pred_fallthru
    _
  %v14 = vld [vmem:[%s0] sm:$0xff]
  %v15 = vld [vmem:[%s1] sm:$0xf]
  %v16 = vld [vmem:[%s2] sm:$0x1]
  %18 = vset.pattern.permute.xlu0 0
  %19 = vperm.xlu0 %18, %v14
  %v20 = vpop.permute.xlu0 %19
  %v22 = vlaneseq
  %v23 = vshrl.u32 %v22, 7
  %v24 = vsub.s32 0, %v23
  %v25 = vrot.slane %v15, %v24
  %v26 = vmul.f32 %v20, %v25
  %v28 = vlaneseq
  %v29 = vshrl.u32 %v28, 7
  %v30 = vsub.s32 0, %v29
  %v31 = vrot.slane %v16, %v30
  %v33 = vadd.f32 %v31, %v26
  %34 = vset.pattern.permute.xlu0 1
  %35 = vperm.xlu0 %34, %v14
  %v36 = vpop.permute.xlu0 %35
  %v38 = vlaneseq
  %v39 = vshrl.u32 %v38, 7
  %v40 = vsub.s32 1, %v39
  %v41 = vrot.slane %v15, %v40
  %v42 = vmul.f32 %v36, %v41
  %v43 = vadd.f32 %v33, %v42
  %44 = vset.pattern.permute.xlu0 2
  %45 = vperm.xlu0 %44, %v14
  %v46 = vpop.permute.xlu0 %45
  %v48 = vlaneseq
  %v49 = vshrl.u32 %v48, 7
  %v50 = vsub.s32 2, %v49
  %v51 = vrot.slane %v15, %v50
  %v52 = vmul.f32 %v46, %v51
  %v53 = vadd.f32 %v43, %v52
  %54 = vset.pattern.permute.xlu0 3
  %55 = vperm.xlu0 %54, %v14
  %v56 = vpop.permute.xlu0 %55
  %v58 = vlaneseq
  %v59 = vshrl.u32 %v58, 7
  %v60 = vsub.s32 3, %v59
  %v61 = vrot.slane %v15, %v60
  %v62 = vmul.f32 %v56, %v61
  %v63 = vadd.f32 %v53, %v62
  %vm64 = vcmask 15360
  %v65 = vsel %vm64, %v63, -inf
  %66 = vmax.xlane.f32.xlu0 %v65
  %v67 = vpop.xlane.xlu0 %66
  %v68 = vsub.f32 %v63, %v67
  %v69 = vmul.f32 %v68, 1.442695
  %v70 = vpow.pop %v69
  %v71 = vsel %vm64, %v70, 0.0
  %72 = vadd.xlane.f32.xlu0 %v71
  %v73 = vpop.xlane.xlu0 %72
  %v74 = vrcp.pop %v73
  %v75 = vmul.f32 %v70, %v74
  %76 = vst.msk [vmem:[%s3] sm:$0xff] %vm64, %v75
  // Predicated region
  $region14: #{policy_forward.1} parent=0 // pred_check
    _
  $region15: #{policy_forward.1} parent=0 // pred_check_branch
    %78 = sbr.rel (0) target = $region17
  $region16: #{policy_forward.1} parent=0 // pred_region
    _
  $region17: #{policy_forward.1} parent=0 // pred_fallthru
    _
  // Predicated region
  $region18: #{policy_forward.1} parent=0 // pred_check
    _
  $region19: #{policy_forward.1} parent=0 // pred_check_branch
    %80 = sbr.rel (0) target = $region21
  $region20: #{policy_forward.1} parent=0 // pred_region
    _
  $region21: #{policy_forward.1} parent=0 // pred_fallthru
    _

</llo_original>
